<compile_context>
chip_gen: v6e
topology: v6e:2x2x1
jax: 0.10.0
libtpu: 0.0.40
codegen_flags: <defaults>
</compile_context>

<pallas_src>
import functools

import jax
import jax.numpy as jnp
from jax import lax
from jax.experimental import pallas as pl
from jax.experimental.pallas import tpu as pltpu

_MiB = 1024 * 1024


def _vmem_limit_bytes() -> int:
    """Generation-aware VMEM limit: ~3/4 of physical, capped at 96 MiB."""
    try:
        cap = int(pltpu.get_tpu_info().vmem_capacity_bytes)
    except Exception:  # conservative fallback (v7x-sized)
        cap = 64 * _MiB
    return int(min(96 * _MiB, max(32 * _MiB, cap * 3 // 4)))


def _const_spec(shape):
    """BlockSpec for an operand that is identical at every grid step.

    Single-buffered (Buffered(1)): constant index map => no re-DMA after step 0,
    so a second buffer would only waste VMEM. Falls back gracefully if the
    installed JAX version does not accept pipeline_mode.
    """
    index_map = lambda i, _n=len(shape): (0,) * _n
    try:
        return pl.BlockSpec(shape, index_map, pipeline_mode=pl.Buffered(1))
    except TypeError:
        return pl.BlockSpec(shape, index_map)


def mha_kernel(x_ref, wqkv_ref, bqkv_ref, wp_ref, bp_ref, o_ref, acc_ref, *,
               num_heads: int, emb_size: int, batch_block: int,
               compute_dtype, approx_reciprocal: bool):
    E = emb_size
    D = E // num_heads
    scaling = E ** 0.5  # divide-after-softmax scale (module semantics)

    wqkv = wqkv_ref[...]            # (E, 3E)  compute_dtype
    wp = wp_ref[...]                # (E, E)   compute_dtype
    bqkv = bqkv_ref[...]            # (1, 3E)  f32
    bp = bp_ref[...]                # (1, E)   f32

    for b in range(batch_block):    # keep batch_block small (vreg pressure)
        xb = x_ref[b].astype(compute_dtype)                         # (N, E)

        # Fused Q|K|V projection: one MXU matmul, f32 accumulation.
        qkv = jnp.dot(xb, wqkv, preferred_element_type=jnp.float32) + bqkv
        qkv_c = qkv.astype(compute_dtype)                           # (N, 3E)

        for h in range(num_heads):                                  # static unroll
            lo = h * D
            qh = qkv_c[:, lo:lo + D]                                # (N, D)
            kh = qkv_c[:, E + lo:E + lo + D]                        # (N, D)
            vh = qkv_c[:, 2 * E + lo:2 * E + lo + D]                # (N, D)

            # energy = 'bhqd,bhkd->bhqk' for this (batch, head); contract
            # dim 1 of both operands -> no explicit K transpose requested.
            energy = lax.dot_general(
                qh, kh, (((1,), (1,)), ((), ())),
                preferred_element_type=jnp.float32)                 # (N, N) f32

            # softmax over last axis, THEN divide by sqrt(E) (module
            # semantics). Scale folded into the denominator; one EUP
            # reciprocal replaces an (N,N) divide + an (N,N) multiply.
            # Softmax math stays f32 (v5e has no bf16 VPU/EUP).
            m = jnp.max(energy, axis=-1, keepdims=True)
            e = jnp.exp(energy - m)
            denom = jnp.sum(e, axis=-1, keepdims=True) * scaling    # (N, 1)
            att = e * pl.reciprocal(denom, approx=approx_reciprocal)

            # out = 'bhal,bhlv->bhav'; store head slice into the compute_dtype
            # VMEM slab (value is cast to compute_dtype before the final
            # matmul anyway, so no precision change).
            head_out = jnp.dot(att.astype(compute_dtype), vh,
                               preferred_element_type=jnp.float32)
            acc_ref[:, lo:lo + D] = head_out.astype(compute_dtype)

        # Final projection from the (N, E) compute_dtype slab.
        proj = jnp.dot(acc_ref[...], wp,
                       preferred_element_type=jnp.float32) + bp
        o_ref[b] = proj.astype(o_ref.dtype)


def multi_head_attention(x, params, *, num_heads: int, mask=None,
                         batch_block: int = 1,
                         compute_dtype=jnp.bfloat16,
                         approx_reciprocal: bool = True):
    """x: (B, N, E). params: dict of PyTorch-convention weights/biases."""
    # TODO(synk): mask_fill path not implemented -- fail loudly, not silently.
    assert mask is None, "mask (mask_fill path) is not implemented"

    B, N, E = x.shape
    assert E % num_heads == 0
    assert B % batch_block == 0

    # Glue: transpose Linear weights (out,in)->(in,out), fuse q|k|v, cast to
    # the MXU compute dtype; biases stay f32 (added to the f32 accumulator).
    wqkv = jnp.concatenate(
        [params["wq"].T, params["wk"].T, params["wv"].T], axis=1
    ).astype(compute_dtype)                                  # (E, 3E)
    wp = params["wp"].T.astype(compute_dtype)                # (E, E)
    bqkv = jnp.concatenate(
        [params["bq"], params["bk"], params["bv"]]
    ).reshape(1, 3 * E).astype(jnp.float32)                  # (1, 3E)
    bp = params["bp"].reshape(1, E).astype(jnp.float32)      # (1, E)

    # Cast x once in the wrapper so the pipelined input blocks are already in
    # compute_dtype (halves x DMA bytes on the bf16 fast path).
    x_c = x.astype(compute_dtype)

    kernel = functools.partial(
        mha_kernel, num_heads=num_heads, emb_size=E, batch_block=batch_block,
        compute_dtype=compute_dtype, approx_reciprocal=approx_reciprocal)

    return pl.pallas_call(
        kernel,
        out_shape=jax.ShapeDtypeStruct((B, N, E), x.dtype),
        grid_spec=pltpu.PrefetchScalarGridSpec(
            num_scalar_prefetch=0,
            grid=(B // batch_block,),
            in_specs=[
                pl.BlockSpec((batch_block, N, E), lambda i: (i, 0, 0)),  # x
                _const_spec((E, 3 * E)),                                 # wqkv
                _const_spec((1, 3 * E)),                                 # bqkv
                _const_spec((E, E)),                                     # wp
                _const_spec((1, E)),                                     # bp
            ],
            out_specs=pl.BlockSpec((batch_block, N, E), lambda i: (i, 0, 0)),
            scratch_shapes=[pltpu.VMEM((N, E), compute_dtype)],          # head slab
        ),
        compiler_params=pltpu.CompilerParams(
            dimension_semantics=("parallel",),
            vmem_limit_bytes=_vmem_limit_bytes(),
        ),
    )(x_c, wqkv, bqkv, wp, bp)


def mha_reference(x, params, *, num_heads: int):
    """Pure-JAX reference mirroring the PyTorch forward exactly."""
    B, N, E = x.shape
    D = E // num_heads

    def lin(x, w, b):  # PyTorch nn.Linear: x @ W.T + b
        return jnp.einsum("bne,oe->bno", x, w) + b

    q = lin(x, params["wq"], params["bq"]).reshape(B, N, num_heads, D).transpose(0, 2, 1, 3)
    k = lin(x, params["wk"], params["bk"]).reshape(B, N, num_heads, D).transpose(0, 2, 1, 3)
    v = lin(x, params["wv"], params["bv"]).reshape(B, N, num_heads, D).transpose(0, 2, 1, 3)

    energy = jnp.einsum("bhqd,bhkd->bhqk", q, k)
    att = jax.nn.softmax(energy, axis=-1) / (E ** 0.5)
    out = jnp.einsum("bhal,bhlv->bhav", att, v)
    out = out.transpose(0, 2, 1, 3).reshape(B, N, E)
    return lin(out, params["wp"], params["bp"])


if __name__ == "__main__":
    # Small shapes consistent with the module: batch=2, seq=8, emb=32, heads=4.
    B, N, E, H = 2, 8, 32, 4

    key = jax.random.PRNGKey(0)
    keys = jax.random.split(key, 10)
    scale = 0.05
    params = {
        "wq": scale * jax.random.normal(keys[0], (E, E), jnp.float32),
        "bq": scale * jax.random.normal(keys[1], (E,), jnp.float32),
        "wk": scale * jax.random.normal(keys[2], (E, E), jnp.float32),
        "bk": scale * jax.random.normal(keys[3], (E,), jnp.float32),
        "wv": scale * jax.random.normal(keys[4], (E, E), jnp.float32),
        "bv": scale * jax.random.normal(keys[5], (E,), jnp.float32),
        "wp": scale * jax.random.normal(keys[6], (E, E), jnp.float32),
        "bp": scale * jax.random.normal(keys[7], (E,), jnp.float32),
    }
    x = jax.random.normal(keys[8], (B, N, E), jnp.float32)

    ref = mha_reference(x, params, num_heads=H)

    # Strict f32 path (exact reciprocal) -- verifies kernel math closely.
    # batch_block=1 keeps the grid at 2 steps (both v7x TCs active).
    out_f32 = multi_head_attention(
        x, params, num_heads=H, batch_block=1,
        compute_dtype=jnp.float32, approx_reciprocal=False)
    out_f32 = jax.block_until_ready(out_f32)
    assert out_f32.shape == (B, N, E)
    assert jnp.allclose(out_f32, ref, atol=1e-4, rtol=1e-4), "f32 mismatch vs reference"

    # Fast path: bf16 MXU matmuls (f32 accumulation) + EUP approx reciprocal.
    out_fast = multi_head_attention(x, params, num_heads=H, batch_block=1)
    out_fast = jax.block_until_ready(out_fast)
    assert out_fast.shape == (B, N, E)
    assert jnp.allclose(out_fast, ref, atol=3e-2, rtol=3e-2), "bf16 mismatch vs reference"

    print("KERNEL_OK")
</pallas_src>

<mosaic_0001>
module attributes {stable_mosaic.version = 11 : i64} {
  func.func @mha_kernel(%arg0: i32, %arg1: memref<1x8x32xf32, #tpu.memory_space<vmem>>, %arg2: memref<32x96xf32, #tpu.memory_space<vmem>>, %arg3: memref<1x96xf32, #tpu.memory_space<vmem>>, %arg4: memref<32x32xf32, #tpu.memory_space<vmem>>, %arg5: memref<1x32xf32, #tpu.memory_space<vmem>>, %arg6: memref<1x8x32xf32, #tpu.memory_space<vmem>>, %arg7: memref<8x32xf32, #tpu.memory_space<vmem>>) attributes {dimension_semantics = [#tpu.dimension_semantics<parallel>], iteration_bounds = array<i64: 2>, scalar_prefetch = 0 : i64, scratch_operands = 1 : i64, tpu.core_type = #tpu.core_type<tc>, window_params = [{transform_indices = @transform_0, window_bounds = array<i64: 1, 8, 32>}, {pipeline_mode = #tpu.pipeline_mode<synchronous>, transform_indices = @transform_1, window_bounds = array<i64: 32, 96>}, {pipeline_mode = #tpu.pipeline_mode<synchronous>, transform_indices = @transform_2, window_bounds = array<i64: 1, 96>}, {pipeline_mode = #tpu.pipeline_mode<synchronous>, transform_indices = @transform_3, window_bounds = array<i64: 32, 32>}, {pipeline_mode = #tpu.pipeline_mode<synchronous>, transform_indices = @transform_4, window_bounds = array<i64: 1, 32>}, {transform_indices = @transform_5, window_bounds = array<i64: 1, 8, 32>}]} {
    %c0 = arith.constant 0 : index
    %c0_0 = arith.constant 0 : index
    %0 = vector.load %arg2[%c0, %c0_0] : memref<32x96xf32, #tpu.memory_space<vmem>>, vector<32x96xf32>
    %c0_1 = arith.constant 0 : index
    %c0_2 = arith.constant 0 : index
    %1 = vector.load %arg4[%c0_1, %c0_2] : memref<32x32xf32, #tpu.memory_space<vmem>>, vector<32x32xf32>
    %c0_3 = arith.constant 0 : index
    %c0_4 = arith.constant 0 : index
    %2 = vector.load %arg3[%c0_3, %c0_4] : memref<1x96xf32, #tpu.memory_space<vmem>>, vector<1x96xf32>
    %c0_5 = arith.constant 0 : index
    %c0_6 = arith.constant 0 : index
    %3 = vector.load %arg5[%c0_5, %c0_6] : memref<1x32xf32, #tpu.memory_space<vmem>>, vector<1x32xf32>
    %c0_7 = arith.constant 0 : index
    %c0_8 = arith.constant 0 : index
    %c0_9 = arith.constant 0 : index
    %4 = vector.load %arg1[%c0_7, %c0_8, %c0_9] : memref<1x8x32xf32, #tpu.memory_space<vmem>>, vector<1x8x32xf32>
    %5 = vector.shape_cast %4 : vector<1x8x32xf32> to vector<8x32xf32>
    %cst = arith.constant dense<0.000000e+00> : vector<8x96xf32>
    %6 = tpu.matmul %5, %0, %cst {dimension_numbers = #tpu.dot_dimension_numbers<[1], [0], [0], [1], [0, 0, 1, 1], [], []>} : vector<8x32xf32>, vector<32x96xf32>, vector<8x96xf32> -> vector<8x96xf32>
    %7 = vector.broadcast %2 : vector<1x96xf32> to vector<8x96xf32>
    %8 = arith.addf %6, %7 : vector<8x96xf32>
    %9 = vector.extract_strided_slice %8 {offsets = [0, 0], sizes = [8, 8], strides = [1, 1]} : vector<8x96xf32> to vector<8x8xf32>
    %10 = vector.extract_strided_slice %8 {offsets = [0, 32], sizes = [8, 8], strides = [1, 1]} : vector<8x96xf32> to vector<8x8xf32>
    %11 = vector.extract_strided_slice %8 {offsets = [0, 64], sizes = [8, 8], strides = [1, 1]} : vector<8x96xf32> to vector<8x8xf32>
    %cst_10 = arith.constant dense<0.000000e+00> : vector<8x8xf32>
    %12 = tpu.matmul %9, %10, %cst_10 {dimension_numbers = #tpu.dot_dimension_numbers<[1], [1], [0], [0], [0, 0, 1, 0], [], []>} : vector<8x8xf32>, vector<8x8xf32>, vector<8x8xf32> -> vector<8x8xf32>
    %cst_11 = arith.constant dense<0xFF800000> : vector<8xf32>
    %13 = vector.multi_reduction <maximumf>, %12, %cst_11 [1] : vector<8x8xf32> to vector<8xf32>
    %14 = vector.shape_cast %13 : vector<8xf32> to vector<8x1xf32>
    %15 = vector.broadcast %14 : vector<8x1xf32> to vector<8x8xf32>
    %16 = arith.subf %12, %15 : vector<8x8xf32>
    %17 = math.exp %16 : vector<8x8xf32>
    %cst_12 = arith.constant dense<0.000000e+00> : vector<8xf32>
    %18 = vector.multi_reduction <add>, %17, %cst_12 [1] : vector<8x8xf32> to vector<8xf32>
    %19 = vector.shape_cast %18 : vector<8xf32> to vector<8x1xf32>
    %cst_13 = arith.constant 5.65685415 : f32
    %20 = vector.broadcast %cst_13 : f32 to vector<8x1xf32>
    %21 = arith.mulf %19, %20 : vector<8x1xf32>
    %22 = tpu.reciprocal %21 : vector<8x1xf32> -> vector<8x1xf32>
    %23 = vector.broadcast %22 : vector<8x1xf32> to vector<8x8xf32>
    %24 = arith.mulf %17, %23 : vector<8x8xf32>
    %cst_14 = arith.constant dense<0.000000e+00> : vector<8x8xf32>
    %25 = tpu.matmul %24, %11, %cst_14 {dimension_numbers = #tpu.dot_dimension_numbers<[1], [0], [0], [1], [0, 0, 1, 1], [], []>} : vector<8x8xf32>, vector<8x8xf32>, vector<8x8xf32> -> vector<8x8xf32>
    %c0_15 = arith.constant 0 : index
    %c0_16 = arith.constant 0 : index
    %26 = vector.load %arg7[%c0_15, %c0_16] : memref<8x32xf32, #tpu.memory_space<vmem>>, vector<8x8xf32>
    tpu.vector_store %arg7[%c0_15, %c0_16], %25 {strides = array<i32>} : memref<8x32xf32, #tpu.memory_space<vmem>>, vector<8x8xf32>,
    %27 = vector.extract_strided_slice %8 {offsets = [0, 8], sizes = [8, 8], strides = [1, 1]} : vector<8x96xf32> to vector<8x8xf32>
    %28 = vector.extract_strided_slice %8 {offsets = [0, 40], sizes = [8, 8], strides = [1, 1]} : vector<8x96xf32> to vector<8x8xf32>
    %29 = vector.extract_strided_slice %8 {offsets = [0, 72], sizes = [8, 8], strides = [1, 1]} : vector<8x96xf32> to vector<8x8xf32>
    %cst_17 = arith.constant dense<0.000000e+00> : vector<8x8xf32>
    %30 = tpu.matmul %27, %28, %cst_17 {dimension_numbers = #tpu.dot_dimension_numbers<[1], [1], [0], [0], [0, 0, 1, 0], [], []>} : vector<8x8xf32>, vector<8x8xf32>, vector<8x8xf32> -> vector<8x8xf32>
    %cst_18 = arith.constant dense<0xFF800000> : vector<8xf32>
    %31 = vector.multi_reduction <maximumf>, %30, %cst_18 [1] : vector<8x8xf32> to vector<8xf32>
    %32 = vector.shape_cast %31 : vector<8xf32> to vector<8x1xf32>
    %33 = vector.broadcast %32 : vector<8x1xf32> to vector<8x8xf32>
    %34 = arith.subf %30, %33 : vector<8x8xf32>
    %35 = math.exp %34 : vector<8x8xf32>
    %cst_19 = arith.constant dense<0.000000e+00> : vector<8xf32>
    %36 = vector.multi_reduction <add>, %35, %cst_19 [1] : vector<8x8xf32> to vector<8xf32>
    %37 = vector.shape_cast %36 : vector<8xf32> to vector<8x1xf32>
    %cst_20 = arith.constant 5.65685415 : f32
    %38 = vector.broadcast %cst_20 : f32 to vector<8x1xf32>
    %39 = arith.mulf %37, %38 : vector<8x1xf32>
    %40 = tpu.reciprocal %39 : vector<8x1xf32> -> vector<8x1xf32>
    %41 = vector.broadcast %40 : vector<8x1xf32> to vector<8x8xf32>
    %42 = arith.mulf %35, %41 : vector<8x8xf32>
    %cst_21 = arith.constant dense<0.000000e+00> : vector<8x8xf32>
    %43 = tpu.matmul %42, %29, %cst_21 {dimension_numbers = #tpu.dot_dimension_numbers<[1], [0], [0], [1], [0, 0, 1, 1], [], []>} : vector<8x8xf32>, vector<8x8xf32>, vector<8x8xf32> -> vector<8x8xf32>
    %c0_22 = arith.constant 0 : index
    %c8 = arith.constant 8 : index
    %44 = vector.load %arg7[%c0_22, %c8] : memref<8x32xf32, #tpu.memory_space<vmem>>, vector<8x8xf32>
    tpu.vector_store %arg7[%c0_22, %c8], %43 {strides = array<i32>} : memref<8x32xf32, #tpu.memory_space<vmem>>, vector<8x8xf32>,
    %45 = vector.extract_strided_slice %8 {offsets = [0, 16], sizes = [8, 8], strides = [1, 1]} : vector<8x96xf32> to vector<8x8xf32>
    %46 = vector.extract_strided_slice %8 {offsets = [0, 48], sizes = [8, 8], strides = [1, 1]} : vector<8x96xf32> to vector<8x8xf32>
    %47 = vector.extract_strided_slice %8 {offsets = [0, 80], sizes = [8, 8], strides = [1, 1]} : vector<8x96xf32> to vector<8x8xf32>
    %cst_23 = arith.constant dense<0.000000e+00> : vector<8x8xf32>
    %48 = tpu.matmul %45, %46, %cst_23 {dimension_numbers = #tpu.dot_dimension_numbers<[1], [1], [0], [0], [0, 0, 1, 0], [], []>} : vector<8x8xf32>, vector<8x8xf32>, vector<8x8xf32> -> vector<8x8xf32>
    %cst_24 = arith.constant dense<0xFF800000> : vector<8xf32>
    %49 = vector.multi_reduction <maximumf>, %48, %cst_24 [1] : vector<8x8xf32> to vector<8xf32>
    %50 = vector.shape_cast %49 : vector<8xf32> to vector<8x1xf32>
    %51 = vector.broadcast %50 : vector<8x1xf32> to vector<8x8xf32>
    %52 = arith.subf %48, %51 : vector<8x8xf32>
    %53 = math.exp %52 : vector<8x8xf32>
    %cst_25 = arith.constant dense<0.000000e+00> : vector<8xf32>
    %54 = vector.multi_reduction <add>, %53, %cst_25 [1] : vector<8x8xf32> to vector<8xf32>
    %55 = vector.shape_cast %54 : vector<8xf32> to vector<8x1xf32>
    %cst_26 = arith.constant 5.65685415 : f32
    %56 = vector.broadcast %cst_26 : f32 to vector<8x1xf32>
    %57 = arith.mulf %55, %56 : vector<8x1xf32>
    %58 = tpu.reciprocal %57 : vector<8x1xf32> -> vector<8x1xf32>
    %59 = vector.broadcast %58 : vector<8x1xf32> to vector<8x8xf32>
    %60 = arith.mulf %53, %59 : vector<8x8xf32>
    %cst_27 = arith.constant dense<0.000000e+00> : vector<8x8xf32>
    %61 = tpu.matmul %60, %47, %cst_27 {dimension_numbers = #tpu.dot_dimension_numbers<[1], [0], [0], [1], [0, 0, 1, 1], [], []>} : vector<8x8xf32>, vector<8x8xf32>, vector<8x8xf32> -> vector<8x8xf32>
    %c0_28 = arith.constant 0 : index
    %c16 = arith.constant 16 : index
    %62 = vector.load %arg7[%c0_28, %c16] : memref<8x32xf32, #tpu.memory_space<vmem>>, vector<8x8xf32>
    tpu.vector_store %arg7[%c0_28, %c16], %61 {strides = array<i32>} : memref<8x32xf32, #tpu.memory_space<vmem>>, vector<8x8xf32>,
    %63 = vector.extract_strided_slice %8 {offsets = [0, 24], sizes = [8, 8], strides = [1, 1]} : vector<8x96xf32> to vector<8x8xf32>
    %64 = vector.extract_strided_slice %8 {offsets = [0, 56], sizes = [8, 8], strides = [1, 1]} : vector<8x96xf32> to vector<8x8xf32>
    %65 = vector.extract_strided_slice %8 {offsets = [0, 88], sizes = [8, 8], strides = [1, 1]} : vector<8x96xf32> to vector<8x8xf32>
    %cst_29 = arith.constant dense<0.000000e+00> : vector<8x8xf32>
    %66 = tpu.matmul %63, %64, %cst_29 {dimension_numbers = #tpu.dot_dimension_numbers<[1], [1], [0], [0], [0, 0, 1, 0], [], []>} : vector<8x8xf32>, vector<8x8xf32>, vector<8x8xf32> -> vector<8x8xf32>
    %cst_30 = arith.constant dense<0xFF800000> : vector<8xf32>
    %67 = vector.multi_reduction <maximumf>, %66, %cst_30 [1] : vector<8x8xf32> to vector<8xf32>
    %68 = vector.shape_cast %67 : vector<8xf32> to vector<8x1xf32>
    %69 = vector.broadcast %68 : vector<8x1xf32> to vector<8x8xf32>
    %70 = arith.subf %66, %69 : vector<8x8xf32>
    %71 = math.exp %70 : vector<8x8xf32>
    %cst_31 = arith.constant dense<0.000000e+00> : vector<8xf32>
    %72 = vector.multi_reduction <add>, %71, %cst_31 [1] : vector<8x8xf32> to vector<8xf32>
    %73 = vector.shape_cast %72 : vector<8xf32> to vector<8x1xf32>
    %cst_32 = arith.constant 5.65685415 : f32
    %74 = vector.broadcast %cst_32 : f32 to vector<8x1xf32>
    %75 = arith.mulf %73, %74 : vector<8x1xf32>
    %76 = tpu.reciprocal %75 : vector<8x1xf32> -> vector<8x1xf32>
    %77 = vector.broadcast %76 : vector<8x1xf32> to vector<8x8xf32>
    %78 = arith.mulf %71, %77 : vector<8x8xf32>
    %cst_33 = arith.constant dense<0.000000e+00> : vector<8x8xf32>
    %79 = tpu.matmul %78, %65, %cst_33 {dimension_numbers = #tpu.dot_dimension_numbers<[1], [0], [0], [1], [0, 0, 1, 1], [], []>} : vector<8x8xf32>, vector<8x8xf32>, vector<8x8xf32> -> vector<8x8xf32>
    %c0_34 = arith.constant 0 : index
    %c24 = arith.constant 24 : index
    %80 = vector.load %arg7[%c0_34, %c24] : memref<8x32xf32, #tpu.memory_space<vmem>>, vector<8x8xf32>
    tpu.vector_store %arg7[%c0_34, %c24], %79 {strides = array<i32>} : memref<8x32xf32, #tpu.memory_space<vmem>>, vector<8x8xf32>,
    %c0_35 = arith.constant 0 : index
    %c0_36 = arith.constant 0 : index
    %81 = vector.load %arg7[%c0_35, %c0_36] : memref<8x32xf32, #tpu.memory_space<vmem>>, vector<8x32xf32>
    %cst_37 = arith.constant dense<0.000000e+00> : vector<8x32xf32>
    %82 = tpu.matmul %81, %1, %cst_37 {dimension_numbers = #tpu.dot_dimension_numbers<[1], [0], [0], [1], [0, 0, 1, 1], [], []>} : vector<8x32xf32>, vector<32x32xf32>, vector<8x32xf32> -> vector<8x32xf32>
    %83 = vector.broadcast %3 : vector<1x32xf32> to vector<8x32xf32>
    %84 = arith.addf %82, %83 : vector<8x32xf32>
    %c0_38 = arith.constant 0 : index
    %c0_39 = arith.constant 0 : index
    %c0_40 = arith.constant 0 : index
    %85 = vector.load %arg6[%c0_38, %c0_39, %c0_40] : memref<1x8x32xf32, #tpu.memory_space<vmem>>, vector<1x8x32xf32>
    %86 = vector.shape_cast %85 : vector<1x8x32xf32> to vector<8x32xf32>
    %87 = vector.shape_cast %84 : vector<8x32xf32> to vector<1x8x32xf32>
    tpu.vector_store %arg6[%c0_38, %c0_39, %c0_40], %87 {strides = array<i32>} : memref<1x8x32xf32, #tpu.memory_space<vmem>>, vector<1x8x32xf32>,
    return
  }
  func.func @transform_0(%arg0: i32) -> (i32, i32, i32) {
    %c0_i32 = arith.constant 0 : i32
    %c0_i32_0 = arith.constant 0 : i32
    %c0_i32_1 = arith.constant 0 : i32
    return %arg0, %c0_i32, %c0_i32_0 : i32, i32, i32
  }
  func.func @transform_1(%arg0: i32) -> (i32, i32) {
    %c0_i32 = arith.constant 0 : i32
    %c0_i32_0 = arith.constant 0 : i32
    %c0_i32_1 = arith.constant 0 : i32
    return %c0_i32, %c0_i32_0 : i32, i32
  }
  func.func @transform_2(%arg0: i32) -> (i32, i32) {
    %c0_i32 = arith.constant 0 : i32
    %c0_i32_0 = arith.constant 0 : i32
    %c0_i32_1 = arith.constant 0 : i32
    return %c0_i32, %c0_i32_0 : i32, i32
  }
  func.func @transform_3(%arg0: i32) -> (i32, i32) {
    %c0_i32 = arith.constant 0 : i32
    %c0_i32_0 = arith.constant 0 : i32
    %c0_i32_1 = arith.constant 0 : i32
    return %c0_i32, %c0_i32_0 : i32, i32
  }
  func.func @transform_4(%arg0: i32) -> (i32, i32) {
    %c0_i32 = arith.constant 0 : i32
    %c0_i32_0 = arith.constant 0 : i32
    %c0_i32_1 = arith.constant 0 : i32
    return %c0_i32, %c0_i32_0 : i32, i32
  }
  func.func @transform_5(%arg0: i32) -> (i32, i32, i32) {
    %c0_i32 = arith.constant 0 : i32
    %c0_i32_0 = arith.constant 0 : i32
    %c0_i32_1 = arith.constant 0 : i32
    return %arg0, %c0_i32, %c0_i32_0 : i32, i32, i32
  }
}

</mosaic_0001>

<llo_original>
// kernel: tpu_custom_call.1
$region0: #{tpu_custom_call.1}
  #allocation0 [shape = 'u32[]', space=smem, size = 0x4, offset = 0x4, fixed_abs, tag = 'smem constant byte address 0x4 - core index']
  #allocation1 [shape = 'u32[144,128]{1,0:T(1,128)}', space=vmem, size = 0x12000, scoped, tag = 'internal scratch']
  #allocation2 [shape = 'f32[8,32]{1,0:T(8,128)}', space=vmem, size = 0x1000, scoped, tag = 'scratch operand']
  %s0 = inlined_call_operand.hbm [shape: f32[2,8,32], index: 0, kind: input, shape index: {}]
  %s1 = inlined_call_operand.hbm [shape: f32[32,96], index: 1, kind: input, shape index: {}]
  %s2 = inlined_call_operand.vmem [shape: f32[1,96], index: 2, kind: input, shape index: {}]
  %s3 = inlined_call_operand.hbm [shape: f32[32,32], index: 3, kind: input, shape index: {}]
  %s4 = inlined_call_operand.vmem [shape: f32[1,32], index: 4, kind: input, shape index: {}]
  %s5 = inlined_call_operand.hbm [shape: f32[2,8,32], index: 5, kind: output, shape index: {}]
  %s6 = sld [smem:[#allocation0]]
  $region65: #{tpu_custom_call.1} parent=0
    _
  %s8 = ssub.s32 1, %s6
  %s9 = scalar_select 0, %s8, %s6
  $region1: #{tpu_custom_call.1} parent=0
    #allocation3 [shape = 'u8[8192]{0}', space=vmem, size = 0x2000, scoped, tag = 'input window, operand 0']
    #allocation4 [shape = 's32[2]{0}', space=sflag, size = 0x8, scoped, tag = 'scoped memory for tpu_custom_call.1']
    #allocation5 [shape = 's32[2]{0}', space=sflag, size = 0x8, scoped, tag = 'scoped memory for tpu_custom_call.1']
    #allocation6 [shape = 'u8[16384]{0}', space=vmem, size = 0x4000, scoped, tag = 'input window, operand 1, single buffered']
    #allocation7 [shape = 's32[1]{0}', space=sflag, size = 0x4, scoped, tag = 'scoped memory for tpu_custom_call.1']
    #allocation8 [shape = 'u8[16384]{0}', space=vmem, size = 0x4000, scoped, tag = 'input window, operand 3, single buffered']
    #allocation9 [shape = 'u8[8192]{0}', space=vmem, size = 0x2000, scoped, tag = 'output window, operand 0']
    %10 = vsyncpa [#allocation4], 0
    %s11 = scalar_lea.sflag [#allocation4], 1
    %12 = vsyncpa %s11, 0
    %13 = vsyncpa [#allocation7], 0
    %14 = vsyncpa [#allocation5], 0
    %s15 = scalar_lea.sflag [#allocation5], 1
    %16 = vsyncpa %s15, 0
    loop: start=0, step=1, limit=4
    $region2: #{tpu_custom_call.1} parent=1 // loop_pre_header
      _
    $region3: #{tpu_custom_call.1} parent=1 // loop_header
      %s18 = sphi 0, %s22
      %p19 = scmp.ge.s32.totalorder %s18, 4
      %s28 = sphi 0, %s30
      %s31 = sphi 0, %s28
      %s32 = sphi 0, %s31
      %s48 = sphi 0, %s32
      %s52 = sphi 0, %s52
      %s54 = sphi 0, %s52
      %s55 = sphi 0, %s54
      %s69 = sphi 0, %s55
      %s73 = sphi 0, %s73
      %s75 = sphi 0, %s73
      %s76 = sphi 0, %s75
      %s90 = sphi 0, %s76
      %s94 = sphi 0, %s94
      %s96 = sphi 0, %s94
      %s97 = sphi 0, %s96
      %s111 = sphi 0, %s97
      %s115 = sphi 0, %s115
      %s117 = sphi 0, %s115
      %s118 = sphi 0, %s117
      %s132 = sphi 0, %s118
      %s138 = sphi 0, %s140
      %s141 = sphi 0, %s138
      %s142 = sphi 0, %s141
      %s158 = sphi 0, %s142
    $region4: #{tpu_custom_call.1} parent=1 // loop_header_branch
      %21 = sbr.rel (%p19) target = $region8
    $region5: #{tpu_custom_call.1} parent=1 // loop_body
      %s23 = ssub.s32 %s18, 1
      %s24 = ssub.s32 %s18, 2
      %s25 = sadd.s32 %s18, 1
      %s26 = ssub.s32 %s18, %s25
      %p27 = scmp.eq.s32.totalorder %s26, 0
      %s29 = sadd.s32 %s28, 1
      %s30 = scalar_select %p27, %s28, %s29
      %p33 = pneg %p27
      %p34 = scmp.eq.s32.totalorder %s18, 1
      %p35 = por %p33, %p34
      %p36 = scmp.ne.s32.totalorder %s28, %s31
      %p37 = scmp.eq.s32.totalorder %s18, 0
      %p38 = por %p36, %p37
      %p39 = scmp.ne.s32.totalorder %s28, %s31
      %p40 = scmp.eq.s32.totalorder %s23, 1
      %p41 = por %p39, %p40
      %p42 = scmp.ne.s32.totalorder %s31, %s32
      %p43 = scmp.eq.s32.totalorder %s23, 0
      %p44 = por %p42, %p43
      %p45 = scmp.ne.s32.totalorder %s31, %s32
      %p46 = scmp.eq.s32.totalorder %s24, 1
      %p47 = por %p45, %p46
      %p49 = scmp.ne.s32.totalorder %s32, %s48
      %p50 = scmp.eq.s32.totalorder %s24, 0
      %p51 = por %p49, %p50
      %s53 = sadd.s32 %s52, 1
      %p56 = scmp.eq.s32.totalorder %s18, 1
      %p57 = scmp.ne.s32.totalorder %s52, %s54
      %p58 = scmp.eq.s32.totalorder %s18, 0
      %p59 = por %p57, %p58
      %p60 = scmp.ne.s32.totalorder %s52, %s54
      %p61 = scmp.eq.s32.totalorder %s23, 1
      %p62 = por %p60, %p61
      %p63 = scmp.ne.s32.totalorder %s54, %s55
      %p64 = scmp.eq.s32.totalorder %s23, 0
      %p65 = por %p63, %p64
      %p66 = scmp.ne.s32.totalorder %s54, %s55
      %p67 = scmp.eq.s32.totalorder %s24, 1
      %p68 = por %p66, %p67
      %p70 = scmp.ne.s32.totalorder %s55, %s69
      %p71 = scmp.eq.s32.totalorder %s24, 0
      %p72 = por %p70, %p71
      %s74 = sadd.s32 %s73, 1
      %p77 = scmp.eq.s32.totalorder %s18, 1
      %p78 = scmp.ne.s32.totalorder %s73, %s75
      %p79 = scmp.eq.s32.totalorder %s18, 0
      %p80 = por %p78, %p79
      %p81 = scmp.ne.s32.totalorder %s73, %s75
      %p82 = scmp.eq.s32.totalorder %s23, 1
      %p83 = por %p81, %p82
      %p84 = scmp.ne.s32.totalorder %s75, %s76
      %p85 = scmp.eq.s32.totalorder %s23, 0
      %p86 = por %p84, %p85
      %p87 = scmp.ne.s32.totalorder %s75, %s76
      %p88 = scmp.eq.s32.totalorder %s24, 1
      %p89 = por %p87, %p88
      %p91 = scmp.ne.s32.totalorder %s76, %s90
      %p92 = scmp.eq.s32.totalorder %s24, 0
      %p93 = por %p91, %p92
      %s95 = sadd.s32 %s94, 1
      %p98 = scmp.eq.s32.totalorder %s18, 1
      %p99 = scmp.ne.s32.totalorder %s94, %s96
      %p100 = scmp.eq.s32.totalorder %s18, 0
      %p101 = por %p99, %p100
      %p102 = scmp.ne.s32.totalorder %s94, %s96
      %p103 = scmp.eq.s32.totalorder %s23, 1
      %p104 = por %p102, %p103
      %p105 = scmp.ne.s32.totalorder %s96, %s97
      %p106 = scmp.eq.s32.totalorder %s23, 0
      %p107 = por %p105, %p106
      %p108 = scmp.ne.s32.totalorder %s96, %s97
      %p109 = scmp.eq.s32.totalorder %s24, 1
      %p110 = por %p108, %p109
      %p112 = scmp.ne.s32.totalorder %s97, %s111
      %p113 = scmp.eq.s32.totalorder %s24, 0
      %p114 = por %p112, %p113
      %s116 = sadd.s32 %s115, 1
      %p119 = scmp.eq.s32.totalorder %s18, 1
      %p120 = scmp.ne.s32.totalorder %s115, %s117
      %p121 = scmp.eq.s32.totalorder %s18, 0
      %p122 = por %p120, %p121
      %p123 = scmp.ne.s32.totalorder %s115, %s117
      %p124 = scmp.eq.s32.totalorder %s23, 1
      %p125 = por %p123, %p124
      %p126 = scmp.ne.s32.totalorder %s117, %s118
      %p127 = scmp.eq.s32.totalorder %s23, 0
      %p128 = por %p126, %p127
      %p129 = scmp.ne.s32.totalorder %s117, %s118
      %p130 = scmp.eq.s32.totalorder %s24, 1
      %p131 = por %p129, %p130
      %p133 = scmp.ne.s32.totalorder %s118, %s132
      %p134 = scmp.eq.s32.totalorder %s24, 0
      %p135 = por %p133, %p134
      %s136 = ssub.s32 %s18, %s25
      %p137 = scmp.eq.s32.totalorder %s136, 0
      %s139 = sadd.s32 %s138, 1
      %s140 = scalar_select %p137, %s138, %s139
      %p143 = pneg %p137
      %p144 = scmp.eq.s32.totalorder %s18, 1
      %p145 = por %p143, %p144
      %p146 = scmp.ne.s32.totalorder %s138, %s141
      %p147 = scmp.eq.s32.totalorder %s18, 0
      %p148 = por %p146, %p147
      %p149 = scmp.ne.s32.totalorder %s138, %s141
      %p150 = scmp.eq.s32.totalorder %s23, 1
      %p151 = por %p149, %p150
      %p152 = scmp.ne.s32.totalorder %s141, %s142
      %p153 = scmp.eq.s32.totalorder %s23, 0
      %p154 = por %p152, %p153
      %p155 = scmp.ne.s32.totalorder %s141, %s142
      %p156 = scmp.eq.s32.totalorder %s24, 1
      %p157 = por %p155, %p156
      %p159 = scmp.ne.s32.totalorder %s142, %s158
      %p160 = scmp.eq.s32.totalorder %s24, 0
      %p161 = por %p159, %p160
      %p162 = scmp.le.s32.totalorder 1, %s18
      %p163 = scmp.lt.s32.totalorder %s18, 3
      %p164 = pnand %p162, %p163
      %p165 = pneg %p164
      // Predicated region
      $region9: #{tpu_custom_call.1} parent=5 // pred_check
        _
      $region10: #{tpu_custom_call.1} parent=5 // pred_check_branch
        %167 = sbr.rel (%p164) target = $region12
      $region11: #{tpu_custom_call.1} parent=5 // pred_region
        %s168 = ssub.s32 %s18, 1
        // Predicated region
        $region13: #{tpu_custom_call.1} parent=11 // pred_check
          %p169 = pneg %p65
        $region14: #{tpu_custom_call.1} parent=11 // pred_check_branch
          %171 = sbr.rel (%p169) target = $region16
        $region15: #{tpu_custom_call.1} parent=11 // pred_region
          %s173 = ssub.s32 512, 512
          %174 = vsyncadd [#allocation7], %s173
          %s175 = sshll.u32 [#allocation6], 4
          %s176 = int_to_ptr.vmem [resolvable:$true] %s175
          %181 = dma.hbm_to_vmem [thread:$0]  %s1, 512, %s176, [#allocation7], 128, 128, 8
        $region16: #{tpu_custom_call.1} parent=11 // pred_fallthru
          _
        // Predicated region
        $region17: #{tpu_custom_call.1} parent=11 // pred_check
          %p182 = pneg %p86
        $region18: #{tpu_custom_call.1} parent=11 // pred_check_branch
          %184 = sbr.rel (%p182) target = $region20
        $region19: #{tpu_custom_call.1} parent=11 // pred_region
          _
        $region20: #{tpu_custom_call.1} parent=11 // pred_fallthru
          _
        // Predicated region
        $region21: #{tpu_custom_call.1} parent=11 // pred_check
          %p185 = pneg %p107
        $region22: #{tpu_custom_call.1} parent=11 // pred_check_branch
          %187 = sbr.rel (%p185) target = $region24
        $region23: #{tpu_custom_call.1} parent=11 // pred_region
          %s189 = ssub.s32 512, 512
          %190 = vsyncadd [#allocation7], %s189
          %s191 = sshll.u32 [#allocation8], 4
          %s192 = int_to_ptr.vmem [resolvable:$true] %s191
          %197 = dma.hbm_to_vmem [thread:$0]  %s3, 512, %s192, [#allocation7], 128, 128, 8
        $region24: #{tpu_custom_call.1} parent=11 // pred_fallthru
          _
        // Predicated region
        $region25: #{tpu_custom_call.1} parent=11 // pred_check
          %p198 = pneg %p128
        $region26: #{tpu_custom_call.1} parent=11 // pred_check_branch
          %200 = sbr.rel (%p198) target = $region28
        $region27: #{tpu_custom_call.1} parent=11 // pred_region
          _
        $region28: #{tpu_custom_call.1} parent=11 // pred_fallthru
          _
      $region12: #{tpu_custom_call.1} parent=5 // pred_fallthru
        _
      %p201 = scmp.lt.s32.totalorder %s18, 2
      // Predicated region
      $region29: #{tpu_custom_call.1} parent=5 // pred_check
        %p202 = pneg %p201
      $region30: #{tpu_custom_call.1} parent=5 // pred_check_branch
        %204 = sbr.rel (%p202) target = $region32
      $region31: #{tpu_custom_call.1} parent=5 // pred_region
        // Predicated region
        $region33: #{tpu_custom_call.1} parent=31 // pred_check
          %p205 = pneg %p38
        $region34: #{tpu_custom_call.1} parent=31 // pred_check_branch
          %207 = sbr.rel (%p205) target = $region36
        $region35: #{tpu_custom_call.1} parent=31 // pred_region
          %s208 = sand.u32 %s28, 1
          %s209 = scalar_lea.sflag [#allocation4], %s208
          %s210 = sand.u32 %s28, 1
          %s211 = smul.addr %s210, 8
          %s212 = scalar_lea.vmem [#allocation3], %s211
          %s214 = ssub.s32 128, 128
          %215 = vsyncadd %s209, %s214
          %s216 = smul.addr %s18, 128
          %s217 = scalar_lea.hbm %s0, %s216
          %s219 = sshll.u32 %s212, 4
          %s220 = int_to_ptr.vmem [resolvable:$true] %s219
          %222 = dma.hbm_to_vmem [thread:$0]  %s217, 128, %s220, %s209
        $region36: #{tpu_custom_call.1} parent=31 // pred_fallthru
          _
      $region32: #{tpu_custom_call.1} parent=5 // pred_fallthru
        _
      %p223 = scmp.le.s32.totalorder 1, %s18
      %p224 = scmp.lt.s32.totalorder %s18, 3
      %p225 = pnand %p223, %p224
      %p226 = pneg %p225
      // Predicated region
      $region37: #{tpu_custom_call.1} parent=5 // pred_check
        _
      $region38: #{tpu_custom_call.1} parent=5 // pred_check_branch
        %228 = sbr.rel (%p225) target = $region40
      $region39: #{tpu_custom_call.1} parent=5 // pred_region
        %s229 = ssub.s32 %s18, 1
        %s230 = sand.u32 %s31, 1
        %s231 = scalar_lea.sflag [#allocation4], %s230
        %s232 = sand.u32 %s31, 1
        %s233 = smul.addr %s232, 8
        %s234 = scalar_lea.vmem [#allocation3], %s233
        // Predicated region
        $region41: #{tpu_custom_call.1} parent=39 // pred_check
          %p235 = pneg %p44
        $region42: #{tpu_custom_call.1} parent=39 // pred_check_branch
          %237 = sbr.rel (%p235) target = $region44
        $region43: #{tpu_custom_call.1} parent=39 // pred_region
          %238 = dma.done %s231, 128
        $region44: #{tpu_custom_call.1} parent=39 // pred_fallthru
          _
        // Predicated region
        $region45: #{tpu_custom_call.1} parent=39 // pred_check
          %p239 = pneg %p65
        $region46: #{tpu_custom_call.1} parent=39 // pred_check_branch
          %241 = sbr.rel (%p239) target = $region48
        $region47: #{tpu_custom_call.1} parent=39 // pred_region
          %242 = dma.done [#allocation7], 512
        $region48: #{tpu_custom_call.1} parent=39 // pred_fallthru
          _
        // Predicated region
        $region49: #{tpu_custom_call.1} parent=39 // pred_check
          %p243 = pneg %p107
        $region50: #{tpu_custom_call.1} parent=39 // pred_check_branch
          %245 = sbr.rel (%p243) target = $region52
        $region51: #{tpu_custom_call.1} parent=39 // pred_region
          %246 = dma.done [#allocation7], 512
        $region52: #{tpu_custom_call.1} parent=39 // pred_fallthru
          _
        %s247 = sand.u32 %s31, 1
        %s248 = scalar_lea.sflag [#allocation4], %s247
        %s249 = sand.u32 %s31, 1
        %s250 = smul.addr %s249, 8
        %s251 = scalar_lea.vmem [#allocation3], %s250
        %p252 = pneg %p44
        %p253 = pneg %p41
        %p254 = pneg %p65
        %p255 = pneg %p62
        %p256 = pneg %p86
        %p257 = pneg %p83
        %p258 = pneg %p107
        %p259 = pneg %p104
        %p260 = pneg %p128
        %p261 = pneg %p125
        %p262 = pneg %p154
        %p263 = pneg %p151
        %s264 = sand.u32 %s141, 1
        %s265 = scalar_lea.sflag [#allocation5], %s264
        %s266 = sand.u32 %s141, 1
        %s267 = smul.addr %s266, 8
        %s268 = scalar_lea.vmem [#allocation9], %s267
        %v269 = vld [vmem:[#allocation6] sm:$0xff]
        %v270 = vld [vmem:[#allocation6 + $0x8] sm:$0xff]
        %v271 = vld [vmem:[#allocation6 + $0x10] sm:$0xff]
        %v272 = vld [vmem:[#allocation6 + $0x18] sm:$0xff]
        %v273 = vld [vmem:[#allocation8] sm:$0xff]
        %v274 = vld [vmem:[#allocation8 + $0x8] sm:$0xff]
        %v275 = vld [vmem:[#allocation8 + $0x10] sm:$0xff]
        %v276 = vld [vmem:[#allocation8 + $0x18] sm:$0xff]
        %v277 = vld [vmem:[%s2] sm:$0x1]
        %v278 = vld [vmem:[%s4] sm:$0x1]
        %v279 = vld [vmem:[%s234] sm:$0xff]
        %v281 = vlaneseq
        %v282 = vshrl.u32 %v281, 7
        %v283 = vsub.s32 0, %v282
        %v284 = vrot.slane %v277, %v283
        %vm286 = vcmask 261120
        %v288 = vsel %vm286, %v279, 0
        %290 = vmatprep.subr.mxu0 0.0
        %291 = vmatpush1.msra.mxu0 0.0
        %292 = vmatprep.subr.mxu0 0.0
        %293 = vmatpush1.msra.mxu0 0.0
        %294 = vmatprep.subr.mxu0 0.0
        %295 = vmatpush1.msra.mxu0 0.0
        %296 = vmatprep.subr.mxu0 0.0
        %297 = vmatpush1.msra.mxu0 0.0
        %298 = vmatprep.subr.mxu0 0.0
        %299 = vmatpush1.msra.mxu0 0.0
        %300 = vmatprep.subr.mxu0 0.0
        %301 = vmatpush1.msra.mxu0 0.0
        %302 = vmatprep.subr.mxu0 0.0
        %303 = vmatpush1.msra.mxu0 0.0
        %304 = vmatprep.subr.mxu0 0.0
        %305 = vmatpush1.msra.mxu0 0.0
        %306 = vmatprep.subr.mxu0 0.0
        %307 = vmatpush1.msra.mxu0 0.0
        %308 = vmatprep.subr.mxu0 0.0
        %309 = vmatpush1.msra.mxu0 0.0
        %310 = vmatprep.subr.mxu0 0.0
        %311 = vmatpush1.msra.mxu0 0.0
        %312 = vmatprep.subr.mxu0 0.0
        %313 = vmatpush1.msra.mxu0 0.0
        %314 = vmatprep.subr.mxu0 0.0
        %315 = vmatpush1.msra.mxu0 %v272
        %316 = vmatprep.subr.mxu0 0.0
        %317 = vmatpush1.msra.mxu0 %v271
        %318 = vmatprep.subr.mxu0 0.0
        %319 = vmatpush1.msra.mxu0 %v270
        %320 = vmatprep.subr.mxu0 0.0
        %321 = vmatpush1.msra.mxu0 %v269
        %322 = vmatprep.subr.mxu0 0.0
        %323 = vmatpush2.msra.mxu0 0.0
        %324 = vmatprep.subr.mxu0 0.0
        %325 = vmatpush2.msra.mxu0 0.0
        %326 = vmatprep.subr.mxu0 0.0
        %327 = vmatpush2.msra.mxu0 0.0
        %328 = vmatprep.subr.mxu0 0.0
        %329 = vmatpush2.msra.mxu0 0.0
        %330 = vmatprep.subr.mxu0 0.0
        %331 = vmatpush2.msra.mxu0 0.0
        %332 = vmatprep.subr.mxu0 0.0
        %333 = vmatpush2.msra.mxu0 0.0
        %334 = vmatprep.subr.mxu0 0.0
        %335 = vmatpush2.msra.mxu0 0.0
        %336 = vmatprep.subr.mxu0 0.0
        %337 = vmatpush2.msra.mxu0 0.0
        %338 = vmatprep.subr.mxu0 0.0
        %339 = vmatpush2.msra.mxu0 0.0
        %340 = vmatprep.subr.mxu0 0.0
        %341 = vmatpush2.msra.mxu0 0.0
        %342 = vmatprep.subr.mxu0 0.0
        %343 = vmatpush2.msra.mxu0 0.0
        %344 = vmatprep.subr.mxu0 0.0
        %345 = vmatpush2.msra.mxu0 0.0
        %346 = vmatprep.subr.mxu0 0.0
        %347 = vmatpush2.msra.mxu0 0.0
        %348 = vmatprep.subr.mxu0 0.0
        %349 = vmatpush2.msra.mxu0 0.0
        %350 = vmatprep.subr.mxu0 0.0
        %351 = vmatpush2.msra.mxu0 0.0
        %352 = vmatprep.subr.mxu0 0.0
        %353 = vmatpush2.msra.mxu0 0.0
        %354 = vmatprep.mubr.f32.mxu0 0.0
        %355 = vmatmul.mubr.f32.gmra.mxu0 %v288
        %v356 = vpop.f32.mrf.mxu0
        %v357 = vadd.f32 %v284, %v356
        %v358 = vpop.f32.mrf.mxu0
        %359 = vdwg.mxu0
        %361 = vrot.lane.b32.xlu0 %v357, 96
        %v362 = vpop.permute.xlu0 %361
        %vm363 = vcmask 64512
        %v364 = vsel %vm363, %v357, 0
        %v366 = vsel %vm363, %v362, 0
        %368 = vmatprep.subr.mxu0 0.0
        %369 = vmatpush1.xpose.msra.mxu0 0.0
        %370 = vmatprep.subr.mxu0 0.0
        %371 = vmatpush1.xpose.msra.mxu0 0.0
        %372 = vmatprep.subr.mxu0 0.0
        %373 = vmatpush1.xpose.msra.mxu0 0.0
        %374 = vmatprep.subr.mxu0 0.0
        %375 = vmatpush1.xpose.msra.mxu0 0.0
        %376 = vmatprep.subr.mxu0 0.0
        %377 = vmatpush1.xpose.msra.mxu0 0.0
        %378 = vmatprep.subr.mxu0 0.0
        %379 = vmatpush1.xpose.msra.mxu0 0.0
        %380 = vmatprep.subr.mxu0 0.0
        %381 = vmatpush1.xpose.msra.mxu0 0.0
        %382 = vmatprep.subr.mxu0 0.0
        %383 = vmatpush1.xpose.msra.mxu0 0.0
        %384 = vmatprep.subr.mxu0 0.0
        %385 = vmatpush1.xpose.msra.mxu0 0.0
        %386 = vmatprep.subr.mxu0 0.0
        %387 = vmatpush1.xpose.msra.mxu0 0.0
        %388 = vmatprep.subr.mxu0 0.0
        %389 = vmatpush1.xpose.msra.mxu0 0.0
        %390 = vmatprep.subr.mxu0 0.0
        %391 = vmatpush1.xpose.msra.mxu0 0.0
        %392 = vmatprep.subr.mxu0 0.0
        %393 = vmatpush1.xpose.msra.mxu0 0.0
        %394 = vmatprep.subr.mxu0 0.0
        %395 = vmatpush1.xpose.msra.mxu0 0.0
        %396 = vmatprep.subr.mxu0 0.0
        %397 = vmatpush1.xpose.msra.mxu0 0.0
        %398 = vmatprep.subr.mxu0 0.0
        %399 = vmatpush1.xpose.msra.mxu0 %v366
        %400 = vmatprep.subr.mxu0 0.0
        %401 = vmatpush2.xpose.msra.mxu0 0.0
        %402 = vmatprep.subr.mxu0 0.0
        %403 = vmatpush2.xpose.msra.mxu0 0.0
        %404 = vmatprep.subr.mxu0 0.0
        %405 = vmatpush2.xpose.msra.mxu0 0.0
        %406 = vmatprep.subr.mxu0 0.0
        %407 = vmatpush2.xpose.msra.mxu0 0.0
        %408 = vmatprep.subr.mxu0 0.0
        %409 = vmatpush2.xpose.msra.mxu0 0.0
        %410 = vmatprep.subr.mxu0 0.0
        %411 = vmatpush2.xpose.msra.mxu0 0.0
        %412 = vmatprep.subr.mxu0 0.0
        %413 = vmatpush2.xpose.msra.mxu0 0.0
        %414 = vmatprep.subr.mxu0 0.0
        %415 = vmatpush2.xpose.msra.mxu0 0.0
        %416 = vmatprep.subr.mxu0 0.0
        %417 = vmatpush2.xpose.msra.mxu0 0.0
        %418 = vmatprep.subr.mxu0 0.0
        %419 = vmatpush2.xpose.msra.mxu0 0.0
        %420 = vmatprep.subr.mxu0 0.0
        %421 = vmatpush2.xpose.msra.mxu0 0.0
        %422 = vmatprep.subr.mxu0 0.0
        %423 = vmatpush2.xpose.msra.mxu0 0.0
        %424 = vmatprep.subr.mxu0 0.0
        %425 = vmatpush2.xpose.msra.mxu0 0.0
        %426 = vmatprep.subr.mxu0 0.0
        %427 = vmatpush2.xpose.msra.mxu0 0.0
        %428 = vmatprep.subr.mxu0 0.0
        %429 = vmatpush2.xpose.msra.mxu0 0.0
        %430 = vmatprep.subr.mxu0 0.0
        %431 = vmatpush2.xpose.msra.mxu0 0.0
        %432 = vmatprep.mubr.f32.mxu0 0.0
        %433 = vmatmul.mubr.f32.gmra.mxu0 %v364
        %v434 = vpop.f32.mrf.mxu0
        %v435 = vadd.f32 0.0, %v434
        %v436 = vpop.f32.mrf.mxu0
        %437 = vdwg.mxu0
        %v438 = vsel %vm363, %v435, -inf
        %439 = vmax.xlane.f32.xlu0 %v438
        %v440 = vpop.xlane.xlu0 %439
        %v441 = vsub.f32 %v435, %v440
        %v442 = vmul.f32 %v441, 1.442695
        %v443 = vpow.pop %v442
        %v444 = vsel %vm363, %v443, 0.0
        %445 = vadd.xlane.f32.xlu0 %v444
        %v446 = vpop.xlane.xlu0 %445
        %v447 = vmul.f32 %v446, 5.656854
        %v448 = vrcp.pop %v447
        %v449 = vmul.f32 %v443, %v448
        %450 = vrot.lane.b32.xlu0 %v357, 64
        %v451 = vpop.permute.xlu0 %450
        %v454 = vsel %vm363, %v449, 0
        %456 = vmatprep.subr.mxu0 0.0
        %457 = vmatpush1.msra.mxu0 0.0
        %458 = vmatprep.subr.mxu0 0.0
        %459 = vmatpush1.msra.mxu0 0.0
        %460 = vmatprep.subr.mxu0 0.0
        %461 = vmatpush1.msra.mxu0 0.0
        %462 = vmatprep.subr.mxu0 0.0
        %463 = vmatpush1.msra.mxu0 0.0
        %464 = vmatprep.subr.mxu0 0.0
        %465 = vmatpush1.msra.mxu0 0.0
        %466 = vmatprep.subr.mxu0 0.0
        %467 = vmatpush1.msra.mxu0 0.0
        %468 = vmatprep.subr.mxu0 0.0
        %469 = vmatpush1.msra.mxu0 0.0
        %470 = vmatprep.subr.mxu0 0.0
        %471 = vmatpush1.msra.mxu0 0.0
        %472 = vmatprep.subr.mxu0 0.0
        %473 = vmatpush1.msra.mxu0 0.0
        %474 = vmatprep.subr.mxu0 0.0
        %475 = vmatpush1.msra.mxu0 0.0
        %476 = vmatprep.subr.mxu0 0.0
        %477 = vmatpush1.msra.mxu0 0.0
        %478 = vmatprep.subr.mxu0 0.0
        %479 = vmatpush1.msra.mxu0 0.0
        %480 = vmatprep.subr.mxu0 0.0
        %481 = vmatpush1.msra.mxu0 0.0
        %482 = vmatprep.subr.mxu0 0.0
        %483 = vmatpush1.msra.mxu0 0.0
        %484 = vmatprep.subr.mxu0 0.0
        %485 = vmatpush1.msra.mxu0 0.0
        %486 = vmatprep.subr.mxu0 0.0
        %487 = vmatpush1.msra.mxu0 %v451
        %488 = vmatprep.subr.mxu0 0.0
        %489 = vmatpush2.msra.mxu0 0.0
        %490 = vmatprep.subr.mxu0 0.0
        %491 = vmatpush2.msra.mxu0 0.0
        %492 = vmatprep.subr.mxu0 0.0
        %493 = vmatpush2.msra.mxu0 0.0
        %494 = vmatprep.subr.mxu0 0.0
        %495 = vmatpush2.msra.mxu0 0.0
        %496 = vmatprep.subr.mxu0 0.0
        %497 = vmatpush2.msra.mxu0 0.0
        %498 = vmatprep.subr.mxu0 0.0
        %499 = vmatpush2.msra.mxu0 0.0
        %500 = vmatprep.subr.mxu0 0.0
        %501 = vmatpush2.msra.mxu0 0.0
        %502 = vmatprep.subr.mxu0 0.0
        %503 = vmatpush2.msra.mxu0 0.0
        %504 = vmatprep.subr.mxu0 0.0
        %505 = vmatpush2.msra.mxu0 0.0
        %506 = vmatprep.subr.mxu0 0.0
        %507 = vmatpush2.msra.mxu0 0.0
        %508 = vmatprep.subr.mxu0 0.0
        %509 = vmatpush2.msra.mxu0 0.0
        %510 = vmatprep.subr.mxu0 0.0
        %511 = vmatpush2.msra.mxu0 0.0
        %512 = vmatprep.subr.mxu0 0.0
        %513 = vmatpush2.msra.mxu0 0.0
        %514 = vmatprep.subr.mxu0 0.0
        %515 = vmatpush2.msra.mxu0 0.0
        %516 = vmatprep.subr.mxu0 0.0
        %517 = vmatpush2.msra.mxu0 0.0
        %518 = vmatprep.subr.mxu0 0.0
        %519 = vmatpush2.msra.mxu0 0.0
        %520 = vmatprep.mubr.f32.mxu0 0.0
        %521 = vmatmul.mubr.f32.gmra.mxu0 %v454
        %v522 = vpop.f32.mrf.mxu0
        %v523 = vadd.f32 0.0, %v522
        %v524 = vpop.f32.mrf.mxu0
        %525 = vdwg.mxu0
        %526 = vst.msk [vmem:[#allocation2] sm:$0xff] %vm363, %v523
        %527 = vrot.lane.b32.xlu0 %v357, 120
        %v528 = vpop.permute.xlu0 %527
        %529 = vrot.lane.b32.xlu0 %v357, 88
        %v530 = vpop.permute.xlu0 %529
        %v531 = vsel %vm363, %v528, 0
        %v533 = vsel %vm363, %v530, 0
        %535 = vmatprep.subr.mxu0 0.0
        %536 = vmatpush1.xpose.msra.mxu0 0.0
        %537 = vmatprep.subr.mxu0 0.0
        %538 = vmatpush1.xpose.msra.mxu0 0.0
        %539 = vmatprep.subr.mxu0 0.0
        %540 = vmatpush1.xpose.msra.mxu0 0.0
        %541 = vmatprep.subr.mxu0 0.0
        %542 = vmatpush1.xpose.msra.mxu0 0.0
        %543 = vmatprep.subr.mxu0 0.0
        %544 = vmatpush1.xpose.msra.mxu0 0.0
        %545 = vmatprep.subr.mxu0 0.0
        %546 = vmatpush1.xpose.msra.mxu0 0.0
        %547 = vmatprep.subr.mxu0 0.0
        %548 = vmatpush1.xpose.msra.mxu0 0.0
        %549 = vmatprep.subr.mxu0 0.0
        %550 = vmatpush1.xpose.msra.mxu0 0.0
        %551 = vmatprep.subr.mxu0 0.0
        %552 = vmatpush1.xpose.msra.mxu0 0.0
        %553 = vmatprep.subr.mxu0 0.0
        %554 = vmatpush1.xpose.msra.mxu0 0.0
        %555 = vmatprep.subr.mxu0 0.0
        %556 = vmatpush1.xpose.msra.mxu0 0.0
        %557 = vmatprep.subr.mxu0 0.0
        %558 = vmatpush1.xpose.msra.mxu0 0.0
        %559 = vmatprep.subr.mxu0 0.0
        %560 = vmatpush1.xpose.msra.mxu0 0.0
        %561 = vmatprep.subr.mxu0 0.0
        %562 = vmatpush1.xpose.msra.mxu0 0.0
        %563 = vmatprep.subr.mxu0 0.0
        %564 = vmatpush1.xpose.msra.mxu0 0.0
        %565 = vmatprep.subr.mxu0 0.0
        %566 = vmatpush1.xpose.msra.mxu0 %v533
        %567 = vmatprep.subr.mxu0 0.0
        %568 = vmatpush2.xpose.msra.mxu0 0.0
        %569 = vmatprep.subr.mxu0 0.0
        %570 = vmatpush2.xpose.msra.mxu0 0.0
        %571 = vmatprep.subr.mxu0 0.0
        %572 = vmatpush2.xpose.msra.mxu0 0.0
        %573 = vmatprep.subr.mxu0 0.0
        %574 = vmatpush2.xpose.msra.mxu0 0.0
        %575 = vmatprep.subr.mxu0 0.0
        %576 = vmatpush2.xpose.msra.mxu0 0.0
        %577 = vmatprep.subr.mxu0 0.0
        %578 = vmatpush2.xpose.msra.mxu0 0.0
        %579 = vmatprep.subr.mxu0 0.0
        %580 = vmatpush2.xpose.msra.mxu0 0.0
        %581 = vmatprep.subr.mxu0 0.0
        %582 = vmatpush2.xpose.msra.mxu0 0.0
        %583 = vmatprep.subr.mxu0 0.0
        %584 = vmatpush2.xpose.msra.mxu0 0.0
        %585 = vmatprep.subr.mxu0 0.0
        %586 = vmatpush2.xpose.msra.mxu0 0.0
        %587 = vmatprep.subr.mxu0 0.0
        %588 = vmatpush2.xpose.msra.mxu0 0.0
        %589 = vmatprep.subr.mxu0 0.0
        %590 = vmatpush2.xpose.msra.mxu0 0.0
        %591 = vmatprep.subr.mxu0 0.0
        %592 = vmatpush2.xpose.msra.mxu0 0.0
        %593 = vmatprep.subr.mxu0 0.0
        %594 = vmatpush2.xpose.msra.mxu0 0.0
        %595 = vmatprep.subr.mxu0 0.0
        %596 = vmatpush2.xpose.msra.mxu0 0.0
        %597 = vmatprep.subr.mxu0 0.0
        %598 = vmatpush2.xpose.msra.mxu0 0.0
        %599 = vmatprep.mubr.f32.mxu0 0.0
        %600 = vmatmul.mubr.f32.gmra.mxu0 %v531
        %v601 = vpop.f32.mrf.mxu0
        %v602 = vadd.f32 0.0, %v601
        %v603 = vpop.f32.mrf.mxu0
        %604 = vdwg.mxu0
        %v605 = vsel %vm363, %v602, -inf
        %606 = vmax.xlane.f32.xlu0 %v605
        %v607 = vpop.xlane.xlu0 %606
        %v608 = vsub.f32 %v602, %v607
        %v609 = vmul.f32 %v608, 1.442695
        %v610 = vpow.pop %v609
        %v611 = vsel %vm363, %v610, 0.0
        %612 = vadd.xlane.f32.xlu0 %v611
        %v613 = vpop.xlane.xlu0 %612
        %v614 = vmul.f32 %v613, 5.656854
        %v615 = vrcp.pop %v614
        %v616 = vmul.f32 %v610, %v615
        %617 = vrot.lane.b32.xlu0 %v357, 56
        %v618 = vpop.permute.xlu0 %617
        %v621 = vsel %vm363, %v616, 0
        %623 = vmatprep.subr.mxu0 0.0
        %624 = vmatpush1.msra.mxu0 0.0
        %625 = vmatprep.subr.mxu0 0.0
        %626 = vmatpush1.msra.mxu0 0.0
        %627 = vmatprep.subr.mxu0 0.0
        %628 = vmatpush1.msra.mxu0 0.0
        %629 = vmatprep.subr.mxu0 0.0
        %630 = vmatpush1.msra.mxu0 0.0
        %631 = vmatprep.subr.mxu0 0.0
        %632 = vmatpush1.msra.mxu0 0.0
        %633 = vmatprep.subr.mxu0 0.0
        %634 = vmatpush1.msra.mxu0 0.0
        %635 = vmatprep.subr.mxu0 0.0
        %636 = vmatpush1.msra.mxu0 0.0
        %637 = vmatprep.subr.mxu0 0.0
        %638 = vmatpush1.msra.mxu0 0.0
        %639 = vmatprep.subr.mxu0 0.0
        %640 = vmatpush1.msra.mxu0 0.0
        %641 = vmatprep.subr.mxu0 0.0
        %642 = vmatpush1.msra.mxu0 0.0
        %643 = vmatprep.subr.mxu0 0.0
        %644 = vmatpush1.msra.mxu0 0.0
        %645 = vmatprep.subr.mxu0 0.0
        %646 = vmatpush1.msra.mxu0 0.0
        %647 = vmatprep.subr.mxu0 0.0
        %648 = vmatpush1.msra.mxu0 0.0
        %649 = vmatprep.subr.mxu0 0.0
        %650 = vmatpush1.msra.mxu0 0.0
        %651 = vmatprep.subr.mxu0 0.0
        %652 = vmatpush1.msra.mxu0 0.0
        %653 = vmatprep.subr.mxu0 0.0
        %654 = vmatpush1.msra.mxu0 %v618
        %655 = vmatprep.subr.mxu0 0.0
        %656 = vmatpush2.msra.mxu0 0.0
        %657 = vmatprep.subr.mxu0 0.0
        %658 = vmatpush2.msra.mxu0 0.0
        %659 = vmatprep.subr.mxu0 0.0
        %660 = vmatpush2.msra.mxu0 0.0
        %661 = vmatprep.subr.mxu0 0.0
        %662 = vmatpush2.msra.mxu0 0.0
        %663 = vmatprep.subr.mxu0 0.0
        %664 = vmatpush2.msra.mxu0 0.0
        %665 = vmatprep.subr.mxu0 0.0
        %666 = vmatpush2.msra.mxu0 0.0
        %667 = vmatprep.subr.mxu0 0.0
        %668 = vmatpush2.msra.mxu0 0.0
        %669 = vmatprep.subr.mxu0 0.0
        %670 = vmatpush2.msra.mxu0 0.0
        %671 = vmatprep.subr.mxu0 0.0
        %672 = vmatpush2.msra.mxu0 0.0
        %673 = vmatprep.subr.mxu0 0.0
        %674 = vmatpush2.msra.mxu0 0.0
        %675 = vmatprep.subr.mxu0 0.0
        %676 = vmatpush2.msra.mxu0 0.0
        %677 = vmatprep.subr.mxu0 0.0
        %678 = vmatpush2.msra.mxu0 0.0
        %679 = vmatprep.subr.mxu0 0.0
        %680 = vmatpush2.msra.mxu0 0.0
        %681 = vmatprep.subr.mxu0 0.0
        %682 = vmatpush2.msra.mxu0 0.0
        %683 = vmatprep.subr.mxu0 0.0
        %684 = vmatpush2.msra.mxu0 0.0
        %685 = vmatprep.subr.mxu0 0.0
        %686 = vmatpush2.msra.mxu0 0.0
        %687 = vmatprep.mubr.f32.mxu0 0.0
        %688 = vmatmul.mubr.f32.gmra.mxu0 %v621
        %v689 = vpop.f32.mrf.mxu0
        %v690 = vadd.f32 0.0, %v689
        %v691 = vpop.f32.mrf.mxu0
        %692 = vdwg.mxu0
        %694 = vrot.lane.b32.xlu0 %v690, 8
        %v695 = vpop.permute.xlu0 %694
        %vm697 = vcmask 130112
        %698 = vst.msk [vmem:[#allocation2] sm:$0xff] %vm697, %v695
        %699 = vrot.lane.b32.xlu0 %v357, 112
        %v700 = vpop.permute.xlu0 %699
        %701 = vrot.lane.b32.xlu0 %v357, 80
        %v702 = vpop.permute.xlu0 %701
        %v703 = vsel %vm363, %v700, 0
        %v705 = vsel %vm363, %v702, 0
        %707 = vmatprep.subr.mxu0 0.0
        %708 = vmatpush1.xpose.msra.mxu0 0.0
        %709 = vmatprep.subr.mxu0 0.0
        %710 = vmatpush1.xpose.msra.mxu0 0.0
        %711 = vmatprep.subr.mxu0 0.0
        %712 = vmatpush1.xpose.msra.mxu0 0.0
        %713 = vmatprep.subr.mxu0 0.0
        %714 = vmatpush1.xpose.msra.mxu0 0.0
        %715 = vmatprep.subr.mxu0 0.0
        %716 = vmatpush1.xpose.msra.mxu0 0.0
        %717 = vmatprep.subr.mxu0 0.0
        %718 = vmatpush1.xpose.msra.mxu0 0.0
        %719 = vmatprep.subr.mxu0 0.0
        %720 = vmatpush1.xpose.msra.mxu0 0.0
        %721 = vmatprep.subr.mxu0 0.0
        %722 = vmatpush1.xpose.msra.mxu0 0.0
        %723 = vmatprep.subr.mxu0 0.0
        %724 = vmatpush1.xpose.msra.mxu0 0.0
        %725 = vmatprep.subr.mxu0 0.0
        %726 = vmatpush1.xpose.msra.mxu0 0.0
        %727 = vmatprep.subr.mxu0 0.0
        %728 = vmatpush1.xpose.msra.mxu0 0.0
        %729 = vmatprep.subr.mxu0 0.0
        %730 = vmatpush1.xpose.msra.mxu0 0.0
        %731 = vmatprep.subr.mxu0 0.0
        %732 = vmatpush1.xpose.msra.mxu0 0.0
        %733 = vmatprep.subr.mxu0 0.0
        %734 = vmatpush1.xpose.msra.mxu0 0.0
        %735 = vmatprep.subr.mxu0 0.0
        %736 = vmatpush1.xpose.msra.mxu0 0.0
        %737 = vmatprep.subr.mxu0 0.0
        %738 = vmatpush1.xpose.msra.mxu0 %v705
        %739 = vmatprep.subr.mxu0 0.0
        %740 = vmatpush2.xpose.msra.mxu0 0.0
        %741 = vmatprep.subr.mxu0 0.0
        %742 = vmatpush2.xpose.msra.mxu0 0.0
        %743 = vmatprep.subr.mxu0 0.0
        %744 = vmatpush2.xpose.msra.mxu0 0.0
        %745 = vmatprep.subr.mxu0 0.0
        %746 = vmatpush2.xpose.msra.mxu0 0.0
        %747 = vmatprep.subr.mxu0 0.0
        %748 = vmatpush2.xpose.msra.mxu0 0.0
        %749 = vmatprep.subr.mxu0 0.0
        %750 = vmatpush2.xpose.msra.mxu0 0.0
        %751 = vmatprep.subr.mxu0 0.0
        %752 = vmatpush2.xpose.msra.mxu0 0.0
        %753 = vmatprep.subr.mxu0 0.0
        %754 = vmatpush2.xpose.msra.mxu0 0.0
        %755 = vmatprep.subr.mxu0 0.0
        %756 = vmatpush2.xpose.msra.mxu0 0.0
        %757 = vmatprep.subr.mxu0 0.0
        %758 = vmatpush2.xpose.msra.mxu0 0.0
        %759 = vmatprep.subr.mxu0 0.0
        %760 = vmatpush2.xpose.msra.mxu0 0.0
        %761 = vmatprep.subr.mxu0 0.0
        %762 = vmatpush2.xpose.msra.mxu0 0.0
        %763 = vmatprep.subr.mxu0 0.0
        %764 = vmatpush2.xpose.msra.mxu0 0.0
        %765 = vmatprep.subr.mxu0 0.0
        %766 = vmatpush2.xpose.msra.mxu0 0.0
        %767 = vmatprep.subr.mxu0 0.0
        %768 = vmatpush2.xpose.msra.mxu0 0.0
        %769 = vmatprep.subr.mxu0 0.0
        %770 = vmatpush2.xpose.msra.mxu0 0.0
        %771 = vmatprep.mubr.f32.mxu0 0.0
        %772 = vmatmul.mubr.f32.gmra.mxu0 %v703
        %v773 = vpop.f32.mrf.mxu0
        %v774 = vadd.f32 0.0, %v773
        %v775 = vpop.f32.mrf.mxu0
        %776 = vdwg.mxu0
        %v777 = vsel %vm363, %v774, -inf
        %778 = vmax.xlane.f32.xlu0 %v777
        %v779 = vpop.xlane.xlu0 %778
        %v780 = vsub.f32 %v774, %v779
        %v781 = vmul.f32 %v780, 1.442695
        %v782 = vpow.pop %v781
        %v783 = vsel %vm363, %v782, 0.0
        %784 = vadd.xlane.f32.xlu0 %v783
        %v785 = vpop.xlane.xlu0 %784
        %v786 = vmul.f32 %v785, 5.656854
        %v787 = vrcp.pop %v786
        %v788 = vmul.f32 %v782, %v787
        %789 = vrot.lane.b32.xlu0 %v357, 48
        %v790 = vpop.permute.xlu0 %789
        %v793 = vsel %vm363, %v788, 0
        %795 = vmatprep.subr.mxu0 0.0
        %796 = vmatpush1.msra.mxu0 0.0
        %797 = vmatprep.subr.mxu0 0.0
        %798 = vmatpush1.msra.mxu0 0.0
        %799 = vmatprep.subr.mxu0 0.0
        %800 = vmatpush1.msra.mxu0 0.0
        %801 = vmatprep.subr.mxu0 0.0
        %802 = vmatpush1.msra.mxu0 0.0
        %803 = vmatprep.subr.mxu0 0.0
        %804 = vmatpush1.msra.mxu0 0.0
        %805 = vmatprep.subr.mxu0 0.0
        %806 = vmatpush1.msra.mxu0 0.0
        %807 = vmatprep.subr.mxu0 0.0
        %808 = vmatpush1.msra.mxu0 0.0
        %809 = vmatprep.subr.mxu0 0.0
        %810 = vmatpush1.msra.mxu0 0.0
        %811 = vmatprep.subr.mxu0 0.0
        %812 = vmatpush1.msra.mxu0 0.0
        %813 = vmatprep.subr.mxu0 0.0
        %814 = vmatpush1.msra.mxu0 0.0
        %815 = vmatprep.subr.mxu0 0.0
        %816 = vmatpush1.msra.mxu0 0.0
        %817 = vmatprep.subr.mxu0 0.0
        %818 = vmatpush1.msra.mxu0 0.0
        %819 = vmatprep.subr.mxu0 0.0
        %820 = vmatpush1.msra.mxu0 0.0
        %821 = vmatprep.subr.mxu0 0.0
        %822 = vmatpush1.msra.mxu0 0.0
        %823 = vmatprep.subr.mxu0 0.0
        %824 = vmatpush1.msra.mxu0 0.0
        %825 = vmatprep.subr.mxu0 0.0
        %826 = vmatpush1.msra.mxu0 %v790
        %827 = vmatprep.subr.mxu0 0.0
        %828 = vmatpush2.msra.mxu0 0.0
        %829 = vmatprep.subr.mxu0 0.0
        %830 = vmatpush2.msra.mxu0 0.0
        %831 = vmatprep.subr.mxu0 0.0
        %832 = vmatpush2.msra.mxu0 0.0
        %833 = vmatprep.subr.mxu0 0.0
        %834 = vmatpush2.msra.mxu0 0.0
        %835 = vmatprep.subr.mxu0 0.0
        %836 = vmatpush2.msra.mxu0 0.0
        %837 = vmatprep.subr.mxu0 0.0
        %838 = vmatpush2.msra.mxu0 0.0
        %839 = vmatprep.subr.mxu0 0.0
        %840 = vmatpush2.msra.mxu0 0.0
        %841 = vmatprep.subr.mxu0 0.0
        %842 = vmatpush2.msra.mxu0 0.0
        %843 = vmatprep.subr.mxu0 0.0
        %844 = vmatpush2.msra.mxu0 0.0
        %845 = vmatprep.subr.mxu0 0.0
        %846 = vmatpush2.msra.mxu0 0.0
        %847 = vmatprep.subr.mxu0 0.0
        %848 = vmatpush2.msra.mxu0 0.0
        %849 = vmatprep.subr.mxu0 0.0
        %850 = vmatpush2.msra.mxu0 0.0
        %851 = vmatprep.subr.mxu0 0.0
        %852 = vmatpush2.msra.mxu0 0.0
        %853 = vmatprep.subr.mxu0 0.0
        %854 = vmatpush2.msra.mxu0 0.0
        %855 = vmatprep.subr.mxu0 0.0
        %856 = vmatpush2.msra.mxu0 0.0
        %857 = vmatprep.subr.mxu0 0.0
        %858 = vmatpush2.msra.mxu0 0.0
        %859 = vmatprep.mubr.f32.mxu0 0.0
        %860 = vmatmul.mubr.f32.gmra.mxu0 %v793
        %v861 = vpop.f32.mrf.mxu0
        %v862 = vadd.f32 0.0, %v861
        %v863 = vpop.f32.mrf.mxu0
        %864 = vdwg.mxu0
        %866 = vrot.lane.b32.xlu0 %v862, 16
        %v867 = vpop.permute.xlu0 %866
        %vm869 = vcmask 195712
        %870 = vst.msk [vmem:[#allocation2] sm:$0xff] %vm869, %v867
        %871 = vrot.lane.b32.xlu0 %v357, 104
        %v872 = vpop.permute.xlu0 %871
        %873 = vrot.lane.b32.xlu0 %v357, 72
        %v874 = vpop.permute.xlu0 %873
        %v875 = vsel %vm363, %v872, 0
        %v877 = vsel %vm363, %v874, 0
        %879 = vmatprep.subr.mxu0 0.0
        %880 = vmatpush1.xpose.msra.mxu0 0.0
        %881 = vmatprep.subr.mxu0 0.0
        %882 = vmatpush1.xpose.msra.mxu0 0.0
        %883 = vmatprep.subr.mxu0 0.0
        %884 = vmatpush1.xpose.msra.mxu0 0.0
        %885 = vmatprep.subr.mxu0 0.0
        %886 = vmatpush1.xpose.msra.mxu0 0.0
        %887 = vmatprep.subr.mxu0 0.0
        %888 = vmatpush1.xpose.msra.mxu0 0.0
        %889 = vmatprep.subr.mxu0 0.0
        %890 = vmatpush1.xpose.msra.mxu0 0.0
        %891 = vmatprep.subr.mxu0 0.0
        %892 = vmatpush1.xpose.msra.mxu0 0.0
        %893 = vmatprep.subr.mxu0 0.0
        %894 = vmatpush1.xpose.msra.mxu0 0.0
        %895 = vmatprep.subr.mxu0 0.0
        %896 = vmatpush1.xpose.msra.mxu0 0.0
        %897 = vmatprep.subr.mxu0 0.0
        %898 = vmatpush1.xpose.msra.mxu0 0.0
        %899 = vmatprep.subr.mxu0 0.0
        %900 = vmatpush1.xpose.msra.mxu0 0.0
        %901 = vmatprep.subr.mxu0 0.0
        %902 = vmatpush1.xpose.msra.mxu0 0.0
        %903 = vmatprep.subr.mxu0 0.0
        %904 = vmatpush1.xpose.msra.mxu0 0.0
        %905 = vmatprep.subr.mxu0 0.0
        %906 = vmatpush1.xpose.msra.mxu0 0.0
        %907 = vmatprep.subr.mxu0 0.0
        %908 = vmatpush1.xpose.msra.mxu0 0.0
        %909 = vmatprep.subr.mxu0 0.0
        %910 = vmatpush1.xpose.msra.mxu0 %v877
        %911 = vmatprep.subr.mxu0 0.0
        %912 = vmatpush2.xpose.msra.mxu0 0.0
        %913 = vmatprep.subr.mxu0 0.0
        %914 = vmatpush2.xpose.msra.mxu0 0.0
        %915 = vmatprep.subr.mxu0 0.0
        %916 = vmatpush2.xpose.msra.mxu0 0.0
        %917 = vmatprep.subr.mxu0 0.0
        %918 = vmatpush2.xpose.msra.mxu0 0.0
        %919 = vmatprep.subr.mxu0 0.0
        %920 = vmatpush2.xpose.msra.mxu0 0.0
        %921 = vmatprep.subr.mxu0 0.0
        %922 = vmatpush2.xpose.msra.mxu0 0.0
        %923 = vmatprep.subr.mxu0 0.0
        %924 = vmatpush2.xpose.msra.mxu0 0.0
        %925 = vmatprep.subr.mxu0 0.0
        %926 = vmatpush2.xpose.msra.mxu0 0.0
        %927 = vmatprep.subr.mxu0 0.0
        %928 = vmatpush2.xpose.msra.mxu0 0.0
        %929 = vmatprep.subr.mxu0 0.0
        %930 = vmatpush2.xpose.msra.mxu0 0.0
        %931 = vmatprep.subr.mxu0 0.0
        %932 = vmatpush2.xpose.msra.mxu0 0.0
        %933 = vmatprep.subr.mxu0 0.0
        %934 = vmatpush2.xpose.msra.mxu0 0.0
        %935 = vmatprep.subr.mxu0 0.0
        %936 = vmatpush2.xpose.msra.mxu0 0.0
        %937 = vmatprep.subr.mxu0 0.0
        %938 = vmatpush2.xpose.msra.mxu0 0.0
        %939 = vmatprep.subr.mxu0 0.0
        %940 = vmatpush2.xpose.msra.mxu0 0.0
        %941 = vmatprep.subr.mxu0 0.0
        %942 = vmatpush2.xpose.msra.mxu0 0.0
        %943 = vmatprep.mubr.f32.mxu0 0.0
        %944 = vmatmul.mubr.f32.gmra.mxu0 %v875
        %v945 = vpop.f32.mrf.mxu0
        %v946 = vadd.f32 0.0, %v945
        %v947 = vpop.f32.mrf.mxu0
        %948 = vdwg.mxu0
        %v949 = vsel %vm363, %v946, -inf
        %950 = vmax.xlane.f32.xlu0 %v949
        %v951 = vpop.xlane.xlu0 %950
        %v952 = vsub.f32 %v946, %v951
        %v953 = vmul.f32 %v952, 1.442695
        %v954 = vpow.pop %v953
        %v955 = vsel %vm363, %v954, 0.0
        %956 = vadd.xlane.f32.xlu0 %v955
        %v957 = vpop.xlane.xlu0 %956
        %v958 = vmul.f32 %v957, 5.656854
        %v959 = vrcp.pop %v958
        %v960 = vmul.f32 %v954, %v959
        %961 = vrot.lane.b32.xlu0 %v357, 40
        %v962 = vpop.permute.xlu0 %961
        %v965 = vsel %vm363, %v960, 0
        %967 = vmatprep.subr.mxu0 0.0
        %968 = vmatpush1.msra.mxu0 0.0
        %969 = vmatprep.subr.mxu0 0.0
        %970 = vmatpush1.msra.mxu0 0.0
        %971 = vmatprep.subr.mxu0 0.0
        %972 = vmatpush1.msra.mxu0 0.0
        %973 = vmatprep.subr.mxu0 0.0
        %974 = vmatpush1.msra.mxu0 0.0
        %975 = vmatprep.subr.mxu0 0.0
        %976 = vmatpush1.msra.mxu0 0.0
        %977 = vmatprep.subr.mxu0 0.0
        %978 = vmatpush1.msra.mxu0 0.0
        %979 = vmatprep.subr.mxu0 0.0
        %980 = vmatpush1.msra.mxu0 0.0
        %981 = vmatprep.subr.mxu0 0.0
        %982 = vmatpush1.msra.mxu0 0.0
        %983 = vmatprep.subr.mxu0 0.0
        %984 = vmatpush1.msra.mxu0 0.0
        %985 = vmatprep.subr.mxu0 0.0
        %986 = vmatpush1.msra.mxu0 0.0
        %987 = vmatprep.subr.mxu0 0.0
        %988 = vmatpush1.msra.mxu0 0.0
        %989 = vmatprep.subr.mxu0 0.0
        %990 = vmatpush1.msra.mxu0 0.0
        %991 = vmatprep.subr.mxu0 0.0
        %992 = vmatpush1.msra.mxu0 0.0
        %993 = vmatprep.subr.mxu0 0.0
        %994 = vmatpush1.msra.mxu0 0.0
        %995 = vmatprep.subr.mxu0 0.0
        %996 = vmatpush1.msra.mxu0 0.0
        %997 = vmatprep.subr.mxu0 0.0
        %998 = vmatpush1.msra.mxu0 %v962
        %999 = vmatprep.subr.mxu0 0.0
        %1000 = vmatpush2.msra.mxu0 0.0
        %1001 = vmatprep.subr.mxu0 0.0
        %1002 = vmatpush2.msra.mxu0 0.0
        %1003 = vmatprep.subr.mxu0 0.0
        %1004 = vmatpush2.msra.mxu0 0.0
        %1005 = vmatprep.subr.mxu0 0.0
        %1006 = vmatpush2.msra.mxu0 0.0
        %1007 = vmatprep.subr.mxu0 0.0
        %1008 = vmatpush2.msra.mxu0 0.0
        %1009 = vmatprep.subr.mxu0 0.0
        %1010 = vmatpush2.msra.mxu0 0.0
        %1011 = vmatprep.subr.mxu0 0.0
        %1012 = vmatpush2.msra.mxu0 0.0
        %1013 = vmatprep.subr.mxu0 0.0
        %1014 = vmatpush2.msra.mxu0 0.0
        %1015 = vmatprep.subr.mxu0 0.0
        %1016 = vmatpush2.msra.mxu0 0.0
        %1017 = vmatprep.subr.mxu0 0.0
        %1018 = vmatpush2.msra.mxu0 0.0
        %1019 = vmatprep.subr.mxu0 0.0
        %1020 = vmatpush2.msra.mxu0 0.0
        %1021 = vmatprep.subr.mxu0 0.0
        %1022 = vmatpush2.msra.mxu0 0.0
        %1023 = vmatprep.subr.mxu0 0.0
        %1024 = vmatpush2.msra.mxu0 0.0
        %1025 = vmatprep.subr.mxu0 0.0
        %1026 = vmatpush2.msra.mxu0 0.0
        %1027 = vmatprep.subr.mxu0 0.0
        %1028 = vmatpush2.msra.mxu0 0.0
        %1029 = vmatprep.subr.mxu0 0.0
        %1030 = vmatpush2.msra.mxu0 0.0
        %1031 = vmatprep.mubr.f32.mxu0 0.0
        %1032 = vmatmul.mubr.f32.gmra.mxu0 %v965
        %v1033 = vpop.f32.mrf.mxu0
        %v1034 = vadd.f32 0.0, %v1033
        %v1035 = vpop.f32.mrf.mxu0
        %1036 = vdwg.mxu0
        %1038 = vrot.lane.b32.xlu0 %v1034, 24
        %v1039 = vpop.permute.xlu0 %1038
        %vm1041 = vcmask 261312
        %1042 = vst.msk [vmem:[#allocation2] sm:$0xff] %vm1041, %v1039
        %v1043 = vld [vmem:[#allocation2] sm:$0xff]
        %v1045 = vlaneseq
        %v1046 = vshrl.u32 %v1045, 7
        %v1047 = vsub.s32 0, %v1046
        %v1048 = vrot.slane %v278, %v1047
        %v1051 = vsel %vm286, %v1043, 0
        %1053 = vmatprep.subr.mxu0 0.0
        %1054 = vmatpush1.msra.mxu0 0.0
        %1055 = vmatprep.subr.mxu0 0.0
        %1056 = vmatpush1.msra.mxu0 0.0
        %1057 = vmatprep.subr.mxu0 0.0
        %1058 = vmatpush1.msra.mxu0 0.0
        %1059 = vmatprep.subr.mxu0 0.0
        %1060 = vmatpush1.msra.mxu0 0.0
        %1061 = vmatprep.subr.mxu0 0.0
        %1062 = vmatpush1.msra.mxu0 0.0
        %1063 = vmatprep.subr.mxu0 0.0
        %1064 = vmatpush1.msra.mxu0 0.0
        %1065 = vmatprep.subr.mxu0 0.0
        %1066 = vmatpush1.msra.mxu0 0.0
        %1067 = vmatprep.subr.mxu0 0.0
        %1068 = vmatpush1.msra.mxu0 0.0
        %1069 = vmatprep.subr.mxu0 0.0
        %1070 = vmatpush1.msra.mxu0 0.0
        %1071 = vmatprep.subr.mxu0 0.0
        %1072 = vmatpush1.msra.mxu0 0.0
        %1073 = vmatprep.subr.mxu0 0.0
        %1074 = vmatpush1.msra.mxu0 0.0
        %1075 = vmatprep.subr.mxu0 0.0
        %1076 = vmatpush1.msra.mxu0 0.0
        %1077 = vmatprep.subr.mxu0 0.0
        %1078 = vmatpush1.msra.mxu0 %v276
        %1079 = vmatprep.subr.mxu0 0.0
        %1080 = vmatpush1.msra.mxu0 %v275
        %1081 = vmatprep.subr.mxu0 0.0
        %1082 = vmatpush1.msra.mxu0 %v274
        %1083 = vmatprep.subr.mxu0 0.0
        %1084 = vmatpush1.msra.mxu0 %v273
        %1085 = vmatprep.subr.mxu0 0.0
        %1086 = vmatpush2.msra.mxu0 0.0
        %1087 = vmatprep.subr.mxu0 0.0
        %1088 = vmatpush2.msra.mxu0 0.0
        %1089 = vmatprep.subr.mxu0 0.0
        %1090 = vmatpush2.msra.mxu0 0.0
        %1091 = vmatprep.subr.mxu0 0.0
        %1092 = vmatpush2.msra.mxu0 0.0
        %1093 = vmatprep.subr.mxu0 0.0
        %1094 = vmatpush2.msra.mxu0 0.0
        %1095 = vmatprep.subr.mxu0 0.0
        %1096 = vmatpush2.msra.mxu0 0.0
        %1097 = vmatprep.subr.mxu0 0.0
        %1098 = vmatpush2.msra.mxu0 0.0
        %1099 = vmatprep.subr.mxu0 0.0
        %1100 = vmatpush2.msra.mxu0 0.0
        %1101 = vmatprep.subr.mxu0 0.0
        %1102 = vmatpush2.msra.mxu0 0.0
        %1103 = vmatprep.subr.mxu0 0.0
        %1104 = vmatpush2.msra.mxu0 0.0
        %1105 = vmatprep.subr.mxu0 0.0
        %1106 = vmatpush2.msra.mxu0 0.0
        %1107 = vmatprep.subr.mxu0 0.0
        %1108 = vmatpush2.msra.mxu0 0.0
        %1109 = vmatprep.subr.mxu0 0.0
        %1110 = vmatpush2.msra.mxu0 0.0
        %1111 = vmatprep.subr.mxu0 0.0
        %1112 = vmatpush2.msra.mxu0 0.0
        %1113 = vmatprep.subr.mxu0 0.0
        %1114 = vmatpush2.msra.mxu0 0.0
        %1115 = vmatprep.subr.mxu0 0.0
        %1116 = vmatpush2.msra.mxu0 0.0
        %1117 = vmatprep.mubr.f32.mxu0 0.0
        %1118 = vmatmul.mubr.f32.gmra.mxu0 %v1051
        %v1119 = vpop.f32.mrf.mxu0
        %v1120 = vadd.f32 %v1048, %v1119
        %v1121 = vpop.f32.mrf.mxu0
        %1122 = vdwg.mxu0
        %1123 = vst.msk [vmem:[%s268] sm:$0xff] %vm286, %v1120
        %s1124 = sand.u32 %s141, 1
        %s1125 = scalar_lea.sflag [#allocation5], %s1124
        %s1126 = sand.u32 %s141, 1
        %s1127 = smul.addr %s1126, 8
        %s1128 = scalar_lea.vmem [#allocation9], %s1127
        // Predicated region
        $region53: #{tpu_custom_call.1} parent=39 // pred_check
          %p1129 = pneg %p151
        $region54: #{tpu_custom_call.1} parent=39 // pred_check_branch
          %1131 = sbr.rel (%p1129) target = $region56
        $region55: #{tpu_custom_call.1} parent=39 // pred_region
          %s1133 = ssub.s32 128, 128
          %1134 = vsyncadd %s1125, %s1133
          %s1135 = smul.addr %s23, 128
          %s1136 = scalar_lea.hbm %s5, %s1135
          %s1138 = sshll.u32 %s1128, 4
          %s1139 = int_to_ptr.vmem [resolvable:$true] %s1138
          %1141 = dma.vmem_to_hbm [thread:$0]  %s1139, 128, %s1136, %s1125
        $region56: #{tpu_custom_call.1} parent=39 // pred_fallthru
          _
      $region40: #{tpu_custom_call.1} parent=5 // pred_fallthru
        _
      %p1142 = scmp.le.s32.totalorder 2, %s18
      // Predicated region
      $region57: #{tpu_custom_call.1} parent=5 // pred_check
        %p1143 = pneg %p1142
      $region58: #{tpu_custom_call.1} parent=5 // pred_check_branch
        %1145 = sbr.rel (%p1143) target = $region60
      $region59: #{tpu_custom_call.1} parent=5 // pred_region
        %s1146 = ssub.s32 %s18, 2
        // Predicated region
        $region61: #{tpu_custom_call.1} parent=59 // pred_check
          %p1147 = pneg %p157
        $region62: #{tpu_custom_call.1} parent=59 // pred_check_branch
          %1149 = sbr.rel (%p1147) target = $region64
        $region63: #{tpu_custom_call.1} parent=59 // pred_region
          %s1150 = sand.u32 %s142, 1
          %s1151 = scalar_lea.sflag [#allocation5], %s1150
          %s1152 = sand.u32 %s142, 1
          %s1153 = smul.addr %s1152, 8
          %s1154 = scalar_lea.vmem [#allocation9], %s1153
          %1155 = dma.done %s1151, 128
        $region64: #{tpu_custom_call.1} parent=59 // pred_fallthru
          _
      $region60: #{tpu_custom_call.1} parent=5 // pred_fallthru
        _
    $region6: #{tpu_custom_call.1} parent=1 // loop_footer
      %s22 = sadd.s32 1, %s18
    $region7: #{tpu_custom_call.1} parent=1 // loop_footer_branch
      %17 = sbr.rel target = $region3
    $region8: #{tpu_custom_call.1} parent=1 // loop_exit
      _
    %1156 = vsyncpa [#allocation4], 1
    %s1157 = scalar_lea.sflag [#allocation4], 1
    %1158 = vsyncpa %s1157, 1
    %1159 = vsyncpa [#allocation7], 1
    %1160 = vsyncpa [#allocation5], 1
    %s1161 = scalar_lea.sflag [#allocation5], 1
    %1162 = vsyncpa %s1161, 1

</llo_original>
